<compile_context>
chip_gen: v6e
topology: v6e:2x2x1
jax: 0.10.0
libtpu: 0.0.40
codegen_flags: <defaults>
</compile_context>

<pallas_src>
from functools import partial

import numpy as np
import jax
import jax.numpy as jnp
from jax.experimental import pallas as pl
from jax.experimental.pallas import tpu as pltpu

AVG_Y3D_CENTER = 0.94677
D_RATIO = 16


# ----------------------------------------------------------------------------
# Offset-table construction (module __init__) -- pure numpy, deterministic.
# The original parses a KITTI calib file; here we use a synthetic, fixed P2.
# ----------------------------------------------------------------------------
def uvy_2_xyz(uvy, P2):
    u, v, y0 = uvy
    P2_3x3 = np.array([P2[0, :3], P2[1, :3], P2[2, :3]])
    P2_inv = np.linalg.inv(P2_3x3)
    cz = y0 / (P2_inv[1, 0] * u + P2_inv[1, 1] * v + P2_inv[1, 2])
    ans = np.matmul(P2_inv, np.array([[u * cz], [v * cz], [cz]]))
    return (ans[0][0], ans[1][0], ans[2][0])


def xyz_2_uv(X, P2):
    x, y, z = X
    X_img = np.matmul(P2, np.array([[x], [y], [z], [1.0]]))
    X_img = X_img / X_img[2, 0]
    u, v = (int(X_img[0, 0]), int(X_img[1, 0]))  # int() truncation, as in ref
    return (u, v)


def build_offset_table(P2, mode="3d_offset_xz", feat_shape=(18, 80)):
    """Replicates the offset table built in PerspectiveConv2d.__init__."""
    fh, fw = feat_shape
    offset = np.zeros((8, 18, fh, fw), dtype=np.float64)
    base_grid = np.array([-1, -1, -1, 0, -1, 1, 0, -1, 0, 0, 0, 1,
                          1, -1, 1, 0, 1, 1], dtype=np.float64)
    for v_f in range(fh):
        for u_f in range(fw):
            v, u = v_f * D_RATIO, u_f * D_RATIO
            if mode == "3d_offset_xz":
                dx, dz = 0.4, 1.0
                x, y, z = uvy_2_xyz((u, v, AVG_Y3D_CENTER), P2)
                pts = [(x - dx, y, z + dz), (x, y, z + dz), (x + dx, y, z + dz),
                       (x - dx, y, z), (x, y, z), (x + dx, y, z),
                       (x - dx, y, z - dz), (x, y, z - dz), (x + dx, y, z - dz)]
                for i, (xi, yi, zi) in enumerate(pts):
                    ui, vi = xyz_2_uv((xi, yi, zi), P2)
                    offset[:, 2 * i, v_f, u_f] = (vi - v) / D_RATIO
                    offset[:, 2 * i + 1, v_f, u_f] = (ui - u) / D_RATIO
            else:
                raise NotImplementedError(mode)
            offset[:, :, v_f, u_f] -= base_grid
    return offset.astype(np.float32)


# ----------------------------------------------------------------------------
# Static bilinear sampling tables (host numpy, built once in __init__).
# Corner weights (incl. validity mask) are folded into a per-corner weight
# table so the per-call glue is a single gather + f32 combine.
# ----------------------------------------------------------------------------
def build_sampling_tables(offset2d, in_hw, K=3, pad=1, stride=(1, 1)):
    """offset2d: (2*K*K, Ho, Wo) batch-independent offset map.
    Returns idx (4, KK, n_pad) int32, wgt (4, KK, n_pad) float32, n_pad."""
    H, W = in_hw
    KK = K * K
    Ho, Wo = offset2d.shape[1], offset2d.shape[2]
    N = Ho * Wo
    n_pad = ((N + 127) // 128) * 128          # lane-dense last dim
    pad_n = n_pad - N

    hh = np.arange(Ho, dtype=np.float64)[:, None]          # (Ho, 1)
    ww = np.arange(Wo, dtype=np.float64)[None, :]          # (1, Wo)
    kh = (np.arange(KK) // K).astype(np.float64)           # (KK,)
    kw = (np.arange(KK) % K).astype(np.float64)

    off_h = offset2d[0::2].astype(np.float64)              # (KK, Ho, Wo)
    off_w = offset2d[1::2].astype(np.float64)

    p_h = hh[None] * stride[0] - pad + kh[:, None, None] + off_h
    p_w = ww[None] * stride[1] - pad + kw[:, None, None] + off_w

    h0 = np.floor(p_h)
    w0 = np.floor(p_w)
    lh = p_h - h0
    lw = p_w - w0

    idx_all, wgt_all = [], []
    for dh, dw, w_bi in ((0, 0, (1 - lh) * (1 - lw)),
                         (0, 1, (1 - lh) * lw),
                         (1, 0, lh * (1 - lw)),
                         (1, 1, lh * lw)):
        hc = h0 + dh
        wc = w0 + dw
        valid = (hc >= 0) & (hc <= H - 1) & (wc >= 0) & (wc <= W - 1)
        hci = np.clip(hc, 0, H - 1).astype(np.int64)
        wci = np.clip(wc, 0, W - 1).astype(np.int64)
        idx = (hci * W + wci).reshape(KK, N)
        wv = (w_bi * valid).reshape(KK, N)
        # Padded columns gather index 0 with weight 0 -> exact zeros.
        idx = np.pad(idx, ((0, 0), (0, pad_n)))
        wv = np.pad(wv, ((0, 0), (0, pad_n)))
        idx_all.append(idx)
        wgt_all.append(wv)

    idx = np.stack(idx_all).astype(np.int32)                # (4, KK, n_pad)
    wgt = np.stack(wgt_all).astype(np.float32)              # (4, KK, n_pad)
    return idx, wgt, n_pad


# ----------------------------------------------------------------------------
# Per-call XLA glue: one gather over x, f32 corner combine, single bf16 cast.
# TODO(synk): no general in-kernel gather on TPU Pallas; this stays in XLA.
# ----------------------------------------------------------------------------
def gather_cols(x, idx, wgt, k2c_pad, dtype=jnp.bfloat16):
    B, Cin, H, W = x.shape
    four, KK, n_pad = idx.shape
    x_flat = x.reshape(B, Cin, H * W)
    g = jnp.take(x_flat, idx.reshape(-1), axis=2)           # (B,Cin,4*KK*n_pad)
    g = g.reshape(B, Cin, four, KK, n_pad)
    cols = jnp.sum(g * wgt[None, None], axis=2)             # f32 pre-sum
    cols = cols.reshape(B, Cin * KK, n_pad)
    pad_k = k2c_pad - Cin * KK
    if pad_k:
        cols = jnp.pad(cols, ((0, 0), (0, pad_k), (0, 0)))
    return cols.astype(dtype)                                # (B, k2c_pad, n_pad)


# ----------------------------------------------------------------------------
# Pallas kernel: bf16 x bf16 conv GEMM on the MXU with f32 accumulation
# directly into the (k-resident) output block; weight held whole in VMEM.
# ----------------------------------------------------------------------------
def _deform_gemm_kernel(cols_ref, w_ref, o_ref):
    # cols_ref: (1, TK, TN)       bf16  -- pre-summed bilinear columns
    # w_ref:    (nK, Coutp, TK)   bf16  -- whole conv weight, VMEM-resident
    # o_ref:    (1, Coutp, TN)    f32   -- block constant across k => accumulator
    k = pl.program_id(2)

    @pl.when(k == 0)
    def _init():
        o_ref[...] = jnp.zeros_like(o_ref)

    o_ref[0] += jnp.dot(w_ref[k], cols_ref[0],
                        preferred_element_type=jnp.float32)


def _round_up(v, m):
    return ((v + m - 1) // m) * m


def _pick_tn(n_pad):
    for tn in (2048, 1536, 1024, 768, 512, 384, 256, 128):
        if n_pad % tn == 0:
            return tn
    return 128


def _pick_tk(k2c, tn, budget=4 * 1024 * 1024):
    """TK is a multiple of 16 (bf16 sublane); the (TK, TN) bf16 cols block
    stays under `budget`.  Prefers a TK that evenly divides the 16-padded K2C
    (no extra padding); otherwise pads K2C up to a multiple of TK."""
    k2c16 = _round_up(k2c, 16)
    max_tk = max(16, (budget // (tn * 2)) // 16 * 16)
    if k2c16 <= max_tk:
        return k2c16, k2c16
    best_div = None
    for tk in range(16, max_tk + 1, 16):
        if k2c16 % tk == 0:
            best_div = tk
    if best_div is not None and best_div >= min(128, max_tk):
        return best_div, k2c16
    tk = (max_tk // 128) * 128 if max_tk >= 128 else max_tk
    return tk, _round_up(k2c16, tk)


@partial(jax.jit, static_argnames=("feat_shape",))
def deform_conv2d_pallas(x, idx, wgt, weight, feat_shape):
    B, Cin, H, W = x.shape
    Cout, _, K, _ = weight.shape
    KK = K * K
    Ho, Wo = feat_shape
    N = Ho * Wo
    K2C = Cin * KK
    n_pad = idx.shape[-1]

    TN = _pick_tn(n_pad)
    TK, K2Cp = _pick_tk(K2C, TN)
    nN = n_pad // TN
    nK = K2Cp // TK
    Coutp = _round_up(Cout, 8)

    # XLA glue: single gather, f32 corner combine, one bf16 cast.
    cols = gather_cols(x, idx, wgt, K2Cp, dtype=jnp.bfloat16)   # (B,K2Cp,n_pad)

    # Conv weight: pad (Cout, K2C) -> (Coutp, K2Cp), split K axis into nK
    # tiles of TK, cast to bf16 (full-rate MXU), shape (nK, Coutp, TK).
    w = weight.reshape(Cout, K2C)
    w = jnp.pad(w, ((0, Coutp - Cout), (0, K2Cp - K2C)))
    w_k = jnp.transpose(w.reshape(Coutp, nK, TK), (1, 0, 2)).astype(jnp.bfloat16)

    out = pl.pallas_call(
        _deform_gemm_kernel,
        out_shape=jax.ShapeDtypeStruct((B, Coutp, n_pad), jnp.float32),
        grid_spec=pltpu.PrefetchScalarGridSpec(
            num_scalar_prefetch=0,
            grid=(B, nN, nK),                       # reduction (K2C) axis last
            in_specs=[
                pl.BlockSpec((1, TK, TN), lambda b, n, k: (b, k, n)),
                # Whole weight with constant index map -> DMA'd once, resident.
                pl.BlockSpec((nK, Coutp, TK), lambda b, n, k: (0, 0, 0)),
            ],
            out_specs=pl.BlockSpec((1, Coutp, TN), lambda b, n, k: (b, 0, n)),
        ),
        compiler_params=pltpu.CompilerParams(
            dimension_semantics=("parallel", "parallel", "arbitrary"),
            vmem_limit_bytes=32 * 1024 * 1024),
    )(cols, w_k)

    out = out[:, :Cout, :N]
    return out.reshape(B, Cout, Ho, Wo)


def deform_conv2d_ref(x, idx, wgt, weight, feat_shape):
    """Pure-JAX f32 reference (same math, no Pallas, no bf16, no padding)."""
    Cout = weight.shape[0]
    Cin = x.shape[1]
    K = weight.shape[2]
    Ho, Wo = feat_shape
    N = Ho * Wo
    cols = gather_cols(x, idx, wgt, Cin * K * K, dtype=jnp.float32)[:, :, :N]
    out = jnp.einsum("ok,bkn->bon", weight.reshape(Cout, -1), cols)
    return out.reshape(x.shape[0], Cout, Ho, Wo)


# ----------------------------------------------------------------------------
# Module-equivalent wrapper
# ----------------------------------------------------------------------------
class PerspectiveConv2dPallas:
    def __init__(self, in_channels, out_channels, mode, P2,
                 kernel_size=3, stride=1, padding=1, bias=False,
                 offset_3d=0.4, input_shape=(18, 80), key=None):
        assert not bias  # regular_conv has bias=False in the reference setup
        kernel_size = kernel_size if isinstance(kernel_size, tuple) else (kernel_size, kernel_size)
        self.stride = stride if isinstance(stride, tuple) else (stride, stride)
        self.padding = padding
        self.mode = mode
        self.feat_shape = tuple(input_shape)
        # Deterministic synthetic weight (stands in for nn.Conv2d weight)
        self.weight = (0.1 * jax.random.normal(
            key, (out_channels, in_channels) + kernel_size, dtype=jnp.float32))
        # Offset table has a fixed leading dim of 8 (B <= 8), all slices
        # identical -- same behavior as the original module.
        self.offset = jnp.asarray(
            build_offset_table(P2, mode=mode, feat_shape=input_shape))
        # Offsets are static: bake bilinear indices + folded corner weights.
        idx_np, wgt_np, _ = build_sampling_tables(
            np.asarray(self.offset[0]), in_hw=self.feat_shape,
            K=kernel_size[0], pad=self.padding, stride=self.stride)
        self.idx = jnp.asarray(idx_np)
        self.wgt = jnp.asarray(wgt_np)

    def __call__(self, inputs):
        x = inputs["features"]
        B = x.shape[0]
        assert B <= 8, "offset table only covers batch <= 8 (as in the original)"
        return deform_conv2d_pallas(x, self.idx, self.wgt, self.weight,
                                    feat_shape=self.feat_shape)


if __name__ == "__main__":
    # Synthetic, deterministic KITTI-like P2 (original parses a calib file).
    P2 = np.array([
        [721.5377, 0.0,      609.5593, 44.85728],
        [0.0,      721.5377, 72.854,   0.2163791],
        [0.0,      0.0,      1.0,      0.002745884],
    ], dtype=np.float64)

    B, Cin, Cout, H, W = 2, 4, 8, 18, 80   # spatial fixed by the offset table

    key = jax.random.PRNGKey(0)
    k_x, k_w = jax.random.split(key)

    conv = PerspectiveConv2dPallas(Cin, Cout, mode="3d_offset_xz", P2=P2, key=k_w)

    x = jax.random.normal(k_x, (B, Cin, H, W), dtype=jnp.float32)
    inputs = {"features": x, "P2": jnp.asarray(P2, dtype=jnp.float32)}

    out = conv(inputs)
    out = jax.block_until_ready(out)

    ref = deform_conv2d_ref(x, conv.idx, conv.wgt, conv.weight,
                            feat_shape=conv.feat_shape)
    # bf16 cols / weight into the MXU -> loosened tolerance vs f32 reference
    np.testing.assert_allclose(np.asarray(out), np.asarray(ref),
                               rtol=2e-2, atol=2e-2)
    assert out.shape == (B, Cout, H, W)
    print("KERNEL_OK")
</pallas_src>

<mosaic_0001>
module attributes {stable_mosaic.version = 11 : i64} {
  func.func @_deform_gemm_kernel(%arg0: i32, %arg1: i32, %arg2: i32, %arg3: memref<1x48x1536xbf16, #tpu.memory_space<vmem>>, %arg4: memref<1x8x48xbf16, #tpu.memory_space<vmem>>, %arg5: memref<1x8x1536xf32, #tpu.memory_space<vmem>>) attributes {dimension_semantics = [#tpu.dimension_semantics<parallel>, #tpu.dimension_semantics<parallel>, #tpu.dimension_semantics<arbitrary>], iteration_bounds = array<i64: 2, 1, 1>, scalar_prefetch = 0 : i64, scratch_operands = 0 : i64, tpu.core_type = #tpu.core_type<tc>, window_params = [{transform_indices = @transform_0, window_bounds = array<i64: 1, 48, 1536>}, {pipeline_mode = #tpu.pipeline_mode<synchronous>, transform_indices = @transform_1, window_bounds = array<i64: 1, 8, 48>}, {transform_indices = @transform_2, window_bounds = array<i64: 1, 8, 1536>}]} {
    %c0_i32 = arith.constant 0 : i32
    %0 = arith.cmpi eq, %arg2, %c0_i32 : i32
    %1 = arith.extui %0 : i1 to i32
    %c0_i32_0 = arith.constant 0 : i32
    %2 = arith.cmpi ne, %1, %c0_i32_0 : i32
    scf.if %2 {
      %cst_11 = arith.constant 0.000000e+00 : f32
      %15 = vector.broadcast %cst_11 : f32 to vector<1x8x1536xf32>
      %c0_12 = arith.constant 0 : index
      %c0_13 = arith.constant 0 : index
      %c0_14 = arith.constant 0 : index
      %16 = vector.load %arg5[%c0_12, %c0_13, %c0_14] : memref<1x8x1536xf32, #tpu.memory_space<vmem>>, vector<1x8x1536xf32>
      tpu.vector_store %arg5[%c0_12, %c0_13, %c0_14], %15 {strides = array<i32>} : memref<1x8x1536xf32, #tpu.memory_space<vmem>>, vector<1x8x1536xf32>,
    } else {
    }
    %c0 = arith.constant 0 : index
    %c0_1 = arith.constant 0 : index
    %c0_2 = arith.constant 0 : index
    %3 = vector.load %arg5[%c0, %c0_1, %c0_2] : memref<1x8x1536xf32, #tpu.memory_space<vmem>>, vector<1x8x1536xf32>
    %4 = vector.shape_cast %3 : vector<1x8x1536xf32> to vector<8x1536xf32>
    %5 = arith.index_cast %arg2 : i32 to index
    %c0_3 = arith.constant 0 : index
    %c0_4 = arith.constant 0 : index
    %6 = vector.load %arg4[%5, %c0_3, %c0_4] : memref<1x8x48xbf16, #tpu.memory_space<vmem>>, vector<1x8x48xbf16>
    %7 = vector.shape_cast %6 : vector<1x8x48xbf16> to vector<8x48xbf16>
    %c0_5 = arith.constant 0 : index
    %c0_6 = arith.constant 0 : index
    %c0_7 = arith.constant 0 : index
    %8 = vector.load %arg3[%c0_5, %c0_6, %c0_7] : memref<1x48x1536xbf16, #tpu.memory_space<vmem>>, vector<1x48x1536xbf16>
    %9 = vector.shape_cast %8 : vector<1x48x1536xbf16> to vector<48x1536xbf16>
    %cst = arith.constant dense<0.000000e+00> : vector<8x1536xf32>
    %10 = tpu.matmul %7, %9, %cst {dimension_numbers = #tpu.dot_dimension_numbers<[1], [0], [0], [1], [0, 0, 1, 1], [], []>} : vector<8x48xbf16>, vector<48x1536xbf16>, vector<8x1536xf32> -> vector<8x1536xf32>
    %11 = arith.addf %4, %10 : vector<8x1536xf32>
    %c0_8 = arith.constant 0 : index
    %c0_9 = arith.constant 0 : index
    %c0_10 = arith.constant 0 : index
    %12 = vector.load %arg5[%c0_8, %c0_9, %c0_10] : memref<1x8x1536xf32, #tpu.memory_space<vmem>>, vector<1x8x1536xf32>
    %13 = vector.shape_cast %12 : vector<1x8x1536xf32> to vector<8x1536xf32>
    %14 = vector.shape_cast %11 : vector<8x1536xf32> to vector<1x8x1536xf32>
    tpu.vector_store %arg5[%c0_8, %c0_9, %c0_10], %14 {strides = array<i32>} : memref<1x8x1536xf32, #tpu.memory_space<vmem>>, vector<1x8x1536xf32>,
    return
  }
  func.func @transform_0(%arg0: i32, %arg1: i32, %arg2: i32) -> (i32, i32, i32) {
    %c0_i32 = arith.constant 0 : i32
    return %arg0, %arg2, %arg1 : i32, i32, i32
  }
  func.func @transform_1(%arg0: i32, %arg1: i32, %arg2: i32) -> (i32, i32, i32) {
    %c0_i32 = arith.constant 0 : i32
    %c0_i32_0 = arith.constant 0 : i32
    %c0_i32_1 = arith.constant 0 : i32
    %c0_i32_2 = arith.constant 0 : i32
    return %c0_i32, %c0_i32_0, %c0_i32_1 : i32, i32, i32
  }
  func.func @transform_2(%arg0: i32, %arg1: i32, %arg2: i32) -> (i32, i32, i32) {
    %c0_i32 = arith.constant 0 : i32
    %c0_i32_0 = arith.constant 0 : i32
    return %arg0, %c0_i32, %arg1 : i32, i32, i32
  }
}

</mosaic_0001>

<llo_original>
// kernel: deform_conv2d_pallas.1
$region0: #{deform_conv2d_pallas.1}
  #allocation0 [shape = 'u32[]', space=smem, size = 0x4, offset = 0x4, fixed_abs, tag = 'smem constant byte address 0x4 - core index']
  #allocation1 [shape = 'u32[144,128]{1,0:T(1,128)}', space=vmem, size = 0x12000, scoped, tag = 'internal scratch']
  %s0 = inlined_call_operand.vmem [shape: bf16[2,48,1536], index: 0, kind: input, shape index: {}]
  %s1 = inlined_call_operand.vmem [shape: bf16[1,8,48], index: 1, kind: input, shape index: {}]
  %s2 = inlined_call_operand.vmem [shape: f32[2,8,1536], index: 2, kind: output, shape index: {}]
  %s3 = sld [smem:[#allocation0]]
  $region45: #{deform_conv2d_pallas.1} parent=0
    _
  %s5 = ssub.s32 1, %s3
  %s6 = scalar_select 0, %s5, %s3
  loop: start=0, step=1, limit=4
  $region2: #{deform_conv2d_pallas.1} parent=0 // loop_pre_header
    _
  $region3: #{deform_conv2d_pallas.1} parent=0 // loop_header
    %s8 = sphi 0, %s12
    %p9 = scmp.ge.s32.totalorder %s8, 4
    %s15 = sphi 0, %s34
    %s16 = sphi 0, %s30
    %s17 = sphi 0, %s26
    %s18 = sphi 0, %s15
    %s19 = sphi 0, %s16
    %s20 = sphi 0, %s17
    %s21 = sphi 0, %s18
    %s22 = sphi 0, %s19
    %s23 = sphi 0, %s20
    %s41 = sphi 0, %s43
    %s44 = sphi 0, %s41
    %s45 = sphi 0, %s44
    %s61 = sphi 0, %s45
    %s65 = sphi 0, %s65
    %s67 = sphi 0, %s65
    %s68 = sphi 0, %s67
    %s82 = sphi 0, %s68
    %s90 = sphi 0, %s92
    %s93 = sphi 0, %s90
    %s94 = sphi 0, %s93
    %s110 = sphi 0, %s94
  $region4: #{deform_conv2d_pallas.1} parent=0 // loop_header_branch
    %11 = sbr.rel (%p9) target = $region8
  $region5: #{deform_conv2d_pallas.1} parent=0 // loop_body
    %s13 = ssub.s32 %s8, 1
    %s14 = ssub.s32 %s8, 2
    %s24 = sadd.s32 1, %s17
    %p25 = scmp.ge.s32.totalorder %s24, 1
    %s26 = scalar_select %p25, 0, %s24
    %s27 = sadd.s32 1, %s16
    %s28 = scalar_select %p25, %s27, %s16
    %p29 = scmp.ge.s32.totalorder %s28, 1
    %s30 = scalar_select %p29, 0, %s28
    %s31 = sadd.s32 1, %s15
    %s32 = scalar_select %p29, %s31, %s15
    %p33 = scmp.ge.s32.totalorder %s32, 2
    %s34 = scalar_select %p33, 0, %s32
    %s35 = ssub.s32 %s15, %s34
    %s36 = ssub.s32 %s17, %s26
    %s37 = sor.u32 %s35, %s36
    %s38 = ssub.s32 %s16, %s30
    %s39 = sor.u32 %s37, %s38
    %p40 = scmp.eq.s32.totalorder %s39, 0
    %s42 = sadd.s32 %s41, 1
    %s43 = scalar_select %p40, %s41, %s42
    %p46 = pneg %p40
    %p47 = scmp.eq.s32.totalorder %s8, 1
    %p48 = por %p46, %p47
    %p49 = scmp.ne.s32.totalorder %s41, %s44
    %p50 = scmp.eq.s32.totalorder %s8, 0
    %p51 = por %p49, %p50
    %p52 = scmp.ne.s32.totalorder %s41, %s44
    %p53 = scmp.eq.s32.totalorder %s13, 1
    %p54 = por %p52, %p53
    %p55 = scmp.ne.s32.totalorder %s44, %s45
    %p56 = scmp.eq.s32.totalorder %s13, 0
    %p57 = por %p55, %p56
    %p58 = scmp.ne.s32.totalorder %s44, %s45
    %p59 = scmp.eq.s32.totalorder %s14, 1
    %p60 = por %p58, %p59
    %p62 = scmp.ne.s32.totalorder %s45, %s61
    %p63 = scmp.eq.s32.totalorder %s14, 0
    %p64 = por %p62, %p63
    %s66 = sadd.s32 %s65, 1
    %p69 = scmp.eq.s32.totalorder %s8, 1
    %p70 = scmp.ne.s32.totalorder %s65, %s67
    %p71 = scmp.eq.s32.totalorder %s8, 0
    %p72 = por %p70, %p71
    %p73 = scmp.ne.s32.totalorder %s65, %s67
    %p74 = scmp.eq.s32.totalorder %s13, 1
    %p75 = por %p73, %p74
    %p76 = scmp.ne.s32.totalorder %s67, %s68
    %p77 = scmp.eq.s32.totalorder %s13, 0
    %p78 = por %p76, %p77
    %p79 = scmp.ne.s32.totalorder %s67, %s68
    %p80 = scmp.eq.s32.totalorder %s14, 1
    %p81 = por %p79, %p80
    %p83 = scmp.ne.s32.totalorder %s68, %s82
    %p84 = scmp.eq.s32.totalorder %s14, 0
    %p85 = por %p83, %p84
    %s86 = ssub.s32 %s15, %s34
    %s87 = ssub.s32 %s16, %s30
    %s88 = sor.u32 %s86, %s87
    %p89 = scmp.eq.s32.totalorder %s88, 0
    %s91 = sadd.s32 %s90, 1
    %s92 = scalar_select %p89, %s90, %s91
    %p95 = pneg %p89
    %p96 = scmp.eq.s32.totalorder %s8, 1
    %p97 = por %p95, %p96
    %p98 = scmp.ne.s32.totalorder %s90, %s93
    %p99 = scmp.eq.s32.totalorder %s8, 0
    %p100 = por %p98, %p99
    %p101 = scmp.ne.s32.totalorder %s90, %s93
    %p102 = scmp.eq.s32.totalorder %s13, 1
    %p103 = por %p101, %p102
    %p104 = scmp.ne.s32.totalorder %s93, %s94
    %p105 = scmp.eq.s32.totalorder %s13, 0
    %p106 = por %p104, %p105
    %p107 = scmp.ne.s32.totalorder %s93, %s94
    %p108 = scmp.eq.s32.totalorder %s14, 1
    %p109 = por %p107, %p108
    %p111 = scmp.ne.s32.totalorder %s94, %s110
    %p112 = scmp.eq.s32.totalorder %s14, 0
    %p113 = por %p111, %p112
    %p114 = scmp.le.s32.totalorder 1, %s8
    %p115 = scmp.lt.s32.totalorder %s8, 3
    %p116 = pnand %p114, %p115
    %p117 = pneg %p116
    // Predicated region
    $region9: #{deform_conv2d_pallas.1} parent=5 // pred_check
      _
    $region10: #{deform_conv2d_pallas.1} parent=5 // pred_check_branch
      %119 = sbr.rel (%p116) target = $region12
    $region11: #{deform_conv2d_pallas.1} parent=5 // pred_region
      %s120 = ssub.s32 %s8, 1
      // Predicated region
      $region13: #{deform_conv2d_pallas.1} parent=11 // pred_check
        %p121 = pneg %p78
      $region14: #{deform_conv2d_pallas.1} parent=11 // pred_check_branch
        %123 = sbr.rel (%p121) target = $region16
      $region15: #{deform_conv2d_pallas.1} parent=11 // pred_region
        _
      $region16: #{deform_conv2d_pallas.1} parent=11 // pred_fallthru
        _
    $region12: #{deform_conv2d_pallas.1} parent=5 // pred_fallthru
      _
    %p124 = scmp.lt.s32.totalorder %s8, 2
    // Predicated region
    $region17: #{deform_conv2d_pallas.1} parent=5 // pred_check
      %p125 = pneg %p124
    $region18: #{deform_conv2d_pallas.1} parent=5 // pred_check_branch
      %127 = sbr.rel (%p125) target = $region20
    $region19: #{deform_conv2d_pallas.1} parent=5 // pred_region
      // Predicated region
      $region21: #{deform_conv2d_pallas.1} parent=19 // pred_check
        %p128 = pneg %p51
      $region22: #{deform_conv2d_pallas.1} parent=19 // pred_check_branch
        %130 = sbr.rel (%p128) target = $region24
      $region23: #{deform_conv2d_pallas.1} parent=19 // pred_region
        %s131 = smul.u32 6, %s17
        %s132 = smul.u32 12, %s16
        %p133 = scmp.lt.s32.totalorder %s15, 1
        %s134 = scalar_select %p133, %s15, 1
        %p135 = scmp.lt.s32.totalorder %s131, 5
        %s136 = scalar_select %p135, %s131, 5
        %p137 = scmp.lt.s32.totalorder %s132, 11
        %s138 = scalar_select %p137, %s132, 11
        %s139 = smul.addr %s136, 12
        %s140 = sadd.s32 %s138, %s139
        %s141 = smul.addr %s134, 72
        %s142 = sadd.s32 %s140, %s141
        %s143 = smul.addr %s142, 4
        %s144 = scalar_lea.vmem %s0, %s143
        %s145 = smul.u32 6, %s17
        %s146 = smul.u32 12, %s16
      $region24: #{deform_conv2d_pallas.1} parent=19 // pred_fallthru
        _
    $region20: #{deform_conv2d_pallas.1} parent=5 // pred_fallthru
      _
    %p147 = scmp.le.s32.totalorder 1, %s8
    %p148 = scmp.lt.s32.totalorder %s8, 3
    %p149 = pnand %p147, %p148
    %p150 = pneg %p149
    // Predicated region
    $region25: #{deform_conv2d_pallas.1} parent=5 // pred_check
      _
    $region26: #{deform_conv2d_pallas.1} parent=5 // pred_check_branch
      %152 = sbr.rel (%p149) target = $region28
    $region27: #{deform_conv2d_pallas.1} parent=5 // pred_region
      %s153 = ssub.s32 %s8, 1
      %s154 = smul.u32 6, %s20
      %s155 = smul.u32 12, %s19
      %p156 = scmp.lt.s32.totalorder %s18, 1
      %s157 = scalar_select %p156, %s18, 1
      %p158 = scmp.lt.s32.totalorder %s154, 5
      %s159 = scalar_select %p158, %s154, 5
      %p160 = scmp.lt.s32.totalorder %s155, 11
      %s161 = scalar_select %p160, %s155, 11
      %s162 = smul.addr %s159, 12
      %s163 = sadd.s32 %s161, %s162
      %s164 = smul.addr %s157, 72
      %s165 = sadd.s32 %s163, %s164
      %s166 = smul.addr %s165, 4
      %s167 = scalar_lea.vmem %s0, %s166
      %p168 = pneg %p57
      %p169 = pneg %p54
      %p170 = pneg %p78
      %p171 = pneg %p75
      %p172 = pneg %p106
      %p173 = pneg %p103
      %s174 = smul.u32 12, %s19
      %p175 = scmp.lt.s32.totalorder %s18, 1
      %s176 = scalar_select %p175, %s18, 1
      %p177 = scmp.lt.s32.totalorder %s174, 11
      %s178 = scalar_select %p177, %s174, 11
      %s179 = smul.addr %s176, 12
      %s180 = sadd.s32 %s178, %s179
      %s181 = smul.addr %s180, 8
      %s182 = scalar_lea.vmem %s2, %s181
      %s183 = smul.u32 6, %s20
      %s184 = smul.u32 12, %s19
      %p185 = scmp.lt.s32.totalorder %s18, 1
      %s186 = scalar_select %p185, %s18, 1
      %p187 = scmp.lt.s32.totalorder %s183, 5
      %s188 = scalar_select %p187, %s183, 5
      %p189 = scmp.lt.s32.totalorder %s184, 11
      %s190 = scalar_select %p189, %s184, 11
      %s191 = smul.addr %s188, 12
      %s192 = sadd.s32 %s190, %s191
      %s193 = smul.addr %s186, 72
      %s194 = sadd.s32 %s192, %s193
      %s195 = smul.addr %s194, 4
      %s196 = scalar_lea.vmem %s0, %s195
      %s197 = smul.u32 6, %s20
      %s198 = smul.u32 12, %s19
      %s199 = smul.u32 12, %s19
      %p200 = scmp.lt.s32.totalorder %s18, 1
      %s201 = scalar_select %p200, %s18, 1
      %p202 = scmp.lt.s32.totalorder %s199, 11
      %s203 = scalar_select %p202, %s199, 11
      %s204 = smul.addr %s201, 12
      %s205 = sadd.s32 %s203, %s204
      %s206 = smul.addr %s205, 8
      %s207 = scalar_lea.vmem %s2, %s206
      %s208 = smul.u32 12, %s19
      %p210 = scmp.eq.s32.totalorder %s20, 0
      // Predicated region
      $region29: #{deform_conv2d_pallas.1} parent=27 // pred_check
        %p211 = pneg %p210
      $region30: #{deform_conv2d_pallas.1} parent=27 // pred_check_branch
        %213 = sbr.rel (%p211) target = $region32
      $region31: #{deform_conv2d_pallas.1} parent=27 // pred_region
        %214 = vst [vmem:[%s207] sm:$0xff] 0.0
        %215 = vst [vmem:[%s207 + $0x8] sm:$0xff] 0.0
        %216 = vst [vmem:[%s207 + $0x10] sm:$0xff] 0.0
        %217 = vst [vmem:[%s207 + $0x18] sm:$0xff] 0.0
        %218 = vst [vmem:[%s207 + $0x20] sm:$0xff] 0.0
        %219 = vst [vmem:[%s207 + $0x28] sm:$0xff] 0.0
        %220 = vst [vmem:[%s207 + $0x30] sm:$0xff] 0.0
        %221 = vst [vmem:[%s207 + $0x38] sm:$0xff] 0.0
        %222 = vst [vmem:[%s207 + $0x40] sm:$0xff] 0.0
        %223 = vst [vmem:[%s207 + $0x48] sm:$0xff] 0.0
        %224 = vst [vmem:[%s207 + $0x50] sm:$0xff] 0.0
        %225 = vst [vmem:[%s207 + $0x58] sm:$0xff] 0.0
      $region32: #{deform_conv2d_pallas.1} parent=27 // pred_fallthru
        _
      %v226 = vld [vmem:[%s207] sm:$0xff]
      %v227 = vld [vmem:[%s207 + $0x8] sm:$0xff]
      %v228 = vld [vmem:[%s207 + $0x10] sm:$0xff]
      %v229 = vld [vmem:[%s207 + $0x18] sm:$0xff]
      %v230 = vld [vmem:[%s207 + $0x20] sm:$0xff]
      %v231 = vld [vmem:[%s207 + $0x28] sm:$0xff]
      %v232 = vld [vmem:[%s207 + $0x30] sm:$0xff]
      %v233 = vld [vmem:[%s207 + $0x38] sm:$0xff]
      %v234 = vld [vmem:[%s207 + $0x40] sm:$0xff]
      %v235 = vld [vmem:[%s207 + $0x48] sm:$0xff]
      %v236 = vld [vmem:[%s207 + $0x50] sm:$0xff]
      %v237 = vld [vmem:[%s207 + $0x58] sm:$0xff]
      %s238 = smul.addr %s20, 4
      %s239 = scalar_lea.vmem %s1, %s238
      %v240 = vld [vmem:[%s239] sm:$0xf]
      %v241 = vld [vmem:[%s196] sm:$0xff]
      %v242 = vld [vmem:[%s196 + $0x8] sm:$0xff]
      %v243 = vld [vmem:[%s196 + $0x10] sm:$0xff]
      %v244 = vld [vmem:[%s196 + $0x18] sm:$0xff]
      %v245 = vld [vmem:[%s196 + $0x20] sm:$0xff]
      %v246 = vld [vmem:[%s196 + $0x28] sm:$0xff]
      %v247 = vld [vmem:[%s196 + $0x30] sm:$0xff]
      %v248 = vld [vmem:[%s196 + $0x38] sm:$0xff]
      %v249 = vld [vmem:[%s196 + $0x40] sm:$0xff]
      %v250 = vld [vmem:[%s196 + $0x48] sm:$0xff]
      %v251 = vld [vmem:[%s196 + $0x50] sm:$0xff]
      %v252 = vld [vmem:[%s196 + $0x58] sm:$0xff]
      %v253 = vld [vmem:[%s196 + $0x60] sm:$0xff]
      %v254 = vld [vmem:[%s196 + $0x68] sm:$0xff]
      %v255 = vld [vmem:[%s196 + $0x70] sm:$0xff]
      %v256 = vld [vmem:[%s196 + $0x78] sm:$0xff]
      %v257 = vld [vmem:[%s196 + $0x80] sm:$0xff]
      %v258 = vld [vmem:[%s196 + $0x88] sm:$0xff]
      %v259 = vld [vmem:[%s196 + $0x90] sm:$0xff]
      %v260 = vld [vmem:[%s196 + $0x98] sm:$0xff]
      %v261 = vld [vmem:[%s196 + $0xa0] sm:$0xff]
      %v262 = vld [vmem:[%s196 + $0xa8] sm:$0xff]
      %v263 = vld [vmem:[%s196 + $0xb0] sm:$0xff]
      %v264 = vld [vmem:[%s196 + $0xb8] sm:$0xff]
      %v265 = vld [vmem:[%s196 + $0xc0] sm:$0xff]
      %v266 = vld [vmem:[%s196 + $0xc8] sm:$0xff]
      %v267 = vld [vmem:[%s196 + $0xd0] sm:$0xff]
      %v268 = vld [vmem:[%s196 + $0xd8] sm:$0xff]
      %v269 = vld [vmem:[%s196 + $0xe0] sm:$0xff]
      %v270 = vld [vmem:[%s196 + $0xe8] sm:$0xff]
      %v271 = vld [vmem:[%s196 + $0xf0] sm:$0xff]
      %v272 = vld [vmem:[%s196 + $0xf8] sm:$0xff]
      %v273 = vld [vmem:[%s196 + $0x100] sm:$0xff]
      %v274 = vld [vmem:[%s196 + $0x108] sm:$0xff]
      %v275 = vld [vmem:[%s196 + $0x110] sm:$0xff]
      %v276 = vld [vmem:[%s196 + $0x118] sm:$0xff]
      %v313 = vunpack.c.l.b16 %v241
      %v314 = vunpack.c.h.b16 %v241
      %v315 = vunpack.c.l.b16 %v242
      %v316 = vunpack.c.h.b16 %v242
      %v317 = vunpack.c.l.b16 %v243
      %v318 = vunpack.c.h.b16 %v243
      %v319 = vunpack.c.l.b16 %v244
      %v320 = vunpack.c.h.b16 %v244
      %v321 = vunpack.c.l.b16 %v245
      %v322 = vunpack.c.h.b16 %v245
      %v323 = vunpack.c.l.b16 %v246
      %v324 = vunpack.c.h.b16 %v246
      %v325 = vunpack.c.l.b16 %v247
      %v326 = vunpack.c.h.b16 %v247
      %v327 = vunpack.c.l.b16 %v248
      %v328 = vunpack.c.h.b16 %v248
      %v329 = vunpack.c.l.b16 %v249
      %v330 = vunpack.c.h.b16 %v249
      %v331 = vunpack.c.l.b16 %v250
      %v332 = vunpack.c.h.b16 %v250
      %v333 = vunpack.c.l.b16 %v251
      %v334 = vunpack.c.h.b16 %v251
      %v335 = vunpack.c.l.b16 %v252
      %v336 = vunpack.c.h.b16 %v252
      %v337 = vunpack.c.l.b16 %v253
      %v338 = vunpack.c.h.b16 %v253
      %v339 = vunpack.c.l.b16 %v254
      %v340 = vunpack.c.h.b16 %v254
      %v341 = vunpack.c.l.b16 %v255
      %v342 = vunpack.c.h.b16 %v255
      %v343 = vunpack.c.l.b16 %v256
      %v344 = vunpack.c.h.b16 %v256
      %v345 = vunpack.c.l.b16 %v257
      %v346 = vunpack.c.h.b16 %v257
      %v347 = vunpack.c.l.b16 %v258
      %v348 = vunpack.c.h.b16 %v258
      %v349 = vunpack.c.l.b16 %v259
      %v350 = vunpack.c.h.b16 %v259
      %v351 = vunpack.c.l.b16 %v260
      %v352 = vunpack.c.h.b16 %v260
      %v353 = vunpack.c.l.b16 %v261
      %v354 = vunpack.c.h.b16 %v261
      %v355 = vunpack.c.l.b16 %v262
      %v356 = vunpack.c.h.b16 %v262
      %v357 = vunpack.c.l.b16 %v263
      %v358 = vunpack.c.h.b16 %v263
      %v359 = vunpack.c.l.b16 %v264
      %v360 = vunpack.c.h.b16 %v264
      %v361 = vunpack.c.l.b16 %v265
      %v362 = vunpack.c.h.b16 %v265
      %v363 = vunpack.c.l.b16 %v266
      %v364 = vunpack.c.h.b16 %v266
      %v365 = vunpack.c.l.b16 %v267
      %v366 = vunpack.c.h.b16 %v267
      %v367 = vunpack.c.l.b16 %v268
      %v368 = vunpack.c.h.b16 %v268
      %v369 = vunpack.c.l.b16 %v269
      %v370 = vunpack.c.h.b16 %v269
      %v371 = vunpack.c.l.b16 %v270
      %v372 = vunpack.c.h.b16 %v270
      %v373 = vunpack.c.l.b16 %v271
      %v374 = vunpack.c.h.b16 %v271
      %v375 = vunpack.c.l.b16 %v272
      %v376 = vunpack.c.h.b16 %v272
      %v377 = vunpack.c.l.b16 %v273
      %v378 = vunpack.c.h.b16 %v273
      %v379 = vunpack.c.l.b16 %v274
      %v380 = vunpack.c.h.b16 %v274
      %v381 = vunpack.c.l.b16 %v275
      %v382 = vunpack.c.h.b16 %v275
      %v383 = vunpack.c.l.b16 %v276
      %v384 = vunpack.c.h.b16 %v276
      %v385 = vpack.c.b16 %v325, %v313
      %v386 = vpack.c.b16 %v326, %v314
      %v387 = vpack.c.b16 %v327, %v315
      %v388 = vpack.c.b16 %v328, %v316
      %v389 = vpack.c.b16 %v329, %v317
      %v390 = vpack.c.b16 %v330, %v318
      %v391 = vpack.c.b16 %v331, %v319
      %v392 = vpack.c.b16 %v332, %v320
      %v393 = vpack.c.b16 %v333, %v321
      %v394 = vpack.c.b16 %v334, %v322
      %v395 = vpack.c.b16 %v335, %v323
      %v396 = vpack.c.b16 %v336, %v324
      %v397 = vpack.c.b16 %v349, %v337
      %v398 = vpack.c.b16 %v350, %v338
      %v399 = vpack.c.b16 %v351, %v339
      %v400 = vpack.c.b16 %v352, %v340
      %v401 = vpack.c.b16 %v353, %v341
      %v402 = vpack.c.b16 %v354, %v342
      %v403 = vpack.c.b16 %v355, %v343
      %v404 = vpack.c.b16 %v356, %v344
      %v405 = vpack.c.b16 %v357, %v345
      %v406 = vpack.c.b16 %v358, %v346
      %v407 = vpack.c.b16 %v359, %v347
      %v408 = vpack.c.b16 %v360, %v348
      %v409 = vpack.c.b16 %v373, %v361
      %v410 = vpack.c.b16 %v374, %v362
      %v411 = vpack.c.b16 %v375, %v363
      %v412 = vpack.c.b16 %v376, %v364
      %v413 = vpack.c.b16 %v377, %v365
      %v414 = vpack.c.b16 %v378, %v366
      %v415 = vpack.c.b16 %v379, %v367
      %v416 = vpack.c.b16 %v380, %v368
      %v417 = vpack.c.b16 %v381, %v369
      %v418 = vpack.c.b16 %v382, %v370
      %v419 = vpack.c.b16 %v383, %v371
      %v420 = vpack.c.b16 %v384, %v372
      %vm457 = vcmask 392192
      %v459 = vsel %vm457, %v240, 0
      %461 = vmatprep.subr.bf16.mxu0 0
      %462 = vmatpush1.bf16.msra.mxu0 0
      %463 = vmatprep.subr.bf16.mxu0 0
      %464 = vmatpush1.bf16.msra.mxu0 0
      %465 = vmatprep.subr.bf16.mxu0 0
      %466 = vmatpush1.bf16.msra.mxu0 0
      %467 = vmatprep.subr.bf16.mxu0 0
      %468 = vmatpush1.bf16.msra.mxu0 0
      %469 = vmatprep.subr.bf16.mxu0 0
      %470 = vmatpush1.bf16.msra.mxu0 0
      %471 = vmatprep.subr.bf16.mxu0 %v410
      %472 = vmatpush1.bf16.msra.mxu0 %v409
      %473 = vmatprep.subr.bf16.mxu0 %v398
      %474 = vmatpush1.bf16.msra.mxu0 %v397
      %475 = vmatprep.subr.bf16.mxu0 %v386
      %476 = vmatpush1.bf16.msra.mxu0 %v385
      %477 = vmatprep.subr.bf16.mxu0 0
      %478 = vmatpush2.bf16.msra.mxu0 0
      %479 = vmatprep.subr.bf16.mxu0 0
      %480 = vmatpush2.bf16.msra.mxu0 0
      %481 = vmatprep.subr.bf16.mxu0 0
      %482 = vmatpush2.bf16.msra.mxu0 0
      %483 = vmatprep.subr.bf16.mxu0 0
      %484 = vmatpush2.bf16.msra.mxu0 0
      %485 = vmatprep.subr.bf16.mxu0 0
      %486 = vmatpush2.bf16.msra.mxu0 0
      %487 = vmatprep.subr.bf16.mxu0 0
      %488 = vmatpush2.bf16.msra.mxu0 0
      %489 = vmatprep.subr.bf16.mxu0 0
      %490 = vmatpush2.bf16.msra.mxu0 0
      %491 = vmatprep.subr.bf16.mxu0 0
      %492 = vmatpush2.bf16.msra.mxu0 0
      %493 = vmatprep.mubr.bf16.mxu0 0
      %494 = vmatmul.mubr.bf16.gmra.mxu0 %v459
      %v495 = vpop.f32.mrf.mxu0
      %v496 = vadd.f32 0.0, %v495
      %v497 = vpop.f32.mrf.mxu0
      %v498 = vadd.f32 0.0, %v497
      %v499 = vpop.f32.mrf.mxu0
      %v500 = vpop.f32.mrf.mxu0
      %501 = vdwg.mxu0
      %502 = vmatprep.subr.bf16.mxu0 0
      %503 = vmatpush1.bf16.msra.mxu0 0
      %504 = vmatprep.subr.bf16.mxu0 0
      %505 = vmatpush1.bf16.msra.mxu0 0
      %506 = vmatprep.subr.bf16.mxu0 0
      %507 = vmatpush1.bf16.msra.mxu0 0
      %508 = vmatprep.subr.bf16.mxu0 0
      %509 = vmatpush1.bf16.msra.mxu0 0
      %510 = vmatprep.subr.bf16.mxu0 0
      %511 = vmatpush1.bf16.msra.mxu0 0
      %512 = vmatprep.subr.bf16.mxu0 %v412
      %513 = vmatpush1.bf16.msra.mxu0 %v411
      %514 = vmatprep.subr.bf16.mxu0 %v400
      %515 = vmatpush1.bf16.msra.mxu0 %v399
      %516 = vmatprep.subr.bf16.mxu0 %v388
      %517 = vmatpush1.bf16.msra.mxu0 %v387
      %518 = vmatprep.subr.bf16.mxu0 0
      %519 = vmatpush2.bf16.msra.mxu0 0
      %520 = vmatprep.subr.bf16.mxu0 0
      %521 = vmatpush2.bf16.msra.mxu0 0
      %522 = vmatprep.subr.bf16.mxu0 0
      %523 = vmatpush2.bf16.msra.mxu0 0
      %524 = vmatprep.subr.bf16.mxu0 0
      %525 = vmatpush2.bf16.msra.mxu0 0
      %526 = vmatprep.subr.bf16.mxu0 0
      %527 = vmatpush2.bf16.msra.mxu0 0
      %528 = vmatprep.subr.bf16.mxu0 0
      %529 = vmatpush2.bf16.msra.mxu0 0
      %530 = vmatprep.subr.bf16.mxu0 0
      %531 = vmatpush2.bf16.msra.mxu0 0
      %532 = vmatprep.subr.bf16.mxu0 0
      %533 = vmatpush2.bf16.msra.mxu0 0
      %534 = vmatprep.mubr.bf16.mxu0 0
      %535 = vmatmul.mubr.bf16.gmra.mxu0 %v459
      %v536 = vpop.f32.mrf.mxu0
      %v537 = vadd.f32 0.0, %v536
      %v538 = vpop.f32.mrf.mxu0
      %v539 = vadd.f32 0.0, %v538
      %v540 = vpop.f32.mrf.mxu0
      %v541 = vpop.f32.mrf.mxu0
      %542 = vdwg.mxu0
      %543 = vmatprep.subr.bf16.mxu0 0
      %544 = vmatpush1.bf16.msra.mxu0 0
      %545 = vmatprep.subr.bf16.mxu0 0
      %546 = vmatpush1.bf16.msra.mxu0 0
      %547 = vmatprep.subr.bf16.mxu0 0
      %548 = vmatpush1.bf16.msra.mxu0 0
      %549 = vmatprep.subr.bf16.mxu0 0
      %550 = vmatpush1.bf16.msra.mxu0 0
      %551 = vmatprep.subr.bf16.mxu0 0
      %552 = vmatpush1.bf16.msra.mxu0 0
      %553 = vmatprep.subr.bf16.mxu0 %v414
      %554 = vmatpush1.bf16.msra.mxu0 %v413
      %555 = vmatprep.subr.bf16.mxu0 %v402
      %556 = vmatpush1.bf16.msra.mxu0 %v401
      %557 = vmatprep.subr.bf16.mxu0 %v390
      %558 = vmatpush1.bf16.msra.mxu0 %v389
      %559 = vmatprep.subr.bf16.mxu0 0
      %560 = vmatpush2.bf16.msra.mxu0 0
      %561 = vmatprep.subr.bf16.mxu0 0
      %562 = vmatpush2.bf16.msra.mxu0 0
      %563 = vmatprep.subr.bf16.mxu0 0
      %564 = vmatpush2.bf16.msra.mxu0 0
      %565 = vmatprep.subr.bf16.mxu0 0
      %566 = vmatpush2.bf16.msra.mxu0 0
      %567 = vmatprep.subr.bf16.mxu0 0
      %568 = vmatpush2.bf16.msra.mxu0 0
      %569 = vmatprep.subr.bf16.mxu0 0
      %570 = vmatpush2.bf16.msra.mxu0 0
      %571 = vmatprep.subr.bf16.mxu0 0
      %572 = vmatpush2.bf16.msra.mxu0 0
      %573 = vmatprep.subr.bf16.mxu0 0
      %574 = vmatpush2.bf16.msra.mxu0 0
      %575 = vmatprep.mubr.bf16.mxu0 0
      %576 = vmatmul.mubr.bf16.gmra.mxu0 %v459
      %v577 = vpop.f32.mrf.mxu0
      %v578 = vadd.f32 0.0, %v577
      %v579 = vpop.f32.mrf.mxu0
      %v580 = vadd.f32 0.0, %v579
      %v581 = vpop.f32.mrf.mxu0
      %v582 = vpop.f32.mrf.mxu0
      %583 = vdwg.mxu0
      %584 = vmatprep.subr.bf16.mxu0 0
      %585 = vmatpush1.bf16.msra.mxu0 0
      %586 = vmatprep.subr.bf16.mxu0 0
      %587 = vmatpush1.bf16.msra.mxu0 0
      %588 = vmatprep.subr.bf16.mxu0 0
      %589 = vmatpush1.bf16.msra.mxu0 0
      %590 = vmatprep.subr.bf16.mxu0 0
      %591 = vmatpush1.bf16.msra.mxu0 0
      %592 = vmatprep.subr.bf16.mxu0 0
      %593 = vmatpush1.bf16.msra.mxu0 0
      %594 = vmatprep.subr.bf16.mxu0 %v416
      %595 = vmatpush1.bf16.msra.mxu0 %v415
      %596 = vmatprep.subr.bf16.mxu0 %v404
      %597 = vmatpush1.bf16.msra.mxu0 %v403
      %598 = vmatprep.subr.bf16.mxu0 %v392
      %599 = vmatpush1.bf16.msra.mxu0 %v391
      %600 = vmatprep.subr.bf16.mxu0 0
      %601 = vmatpush2.bf16.msra.mxu0 0
      %602 = vmatprep.subr.bf16.mxu0 0
      %603 = vmatpush2.bf16.msra.mxu0 0
      %604 = vmatprep.subr.bf16.mxu0 0
      %605 = vmatpush2.bf16.msra.mxu0 0
      %606 = vmatprep.subr.bf16.mxu0 0
      %607 = vmatpush2.bf16.msra.mxu0 0
      %608 = vmatprep.subr.bf16.mxu0 0
      %609 = vmatpush2.bf16.msra.mxu0 0
      %610 = vmatprep.subr.bf16.mxu0 0
      %611 = vmatpush2.bf16.msra.mxu0 0
      %612 = vmatprep.subr.bf16.mxu0 0
      %613 = vmatpush2.bf16.msra.mxu0 0
      %614 = vmatprep.subr.bf16.mxu0 0
      %615 = vmatpush2.bf16.msra.mxu0 0
      %616 = vmatprep.mubr.bf16.mxu0 0
      %617 = vmatmul.mubr.bf16.gmra.mxu0 %v459
      %v618 = vpop.f32.mrf.mxu0
      %v619 = vadd.f32 0.0, %v618
      %v620 = vpop.f32.mrf.mxu0
      %v621 = vadd.f32 0.0, %v620
      %v622 = vpop.f32.mrf.mxu0
      %v623 = vpop.f32.mrf.mxu0
      %624 = vdwg.mxu0
      %625 = vmatprep.subr.bf16.mxu0 0
      %626 = vmatpush1.bf16.msra.mxu0 0
      %627 = vmatprep.subr.bf16.mxu0 0
      %628 = vmatpush1.bf16.msra.mxu0 0
      %629 = vmatprep.subr.bf16.mxu0 0
      %630 = vmatpush1.bf16.msra.mxu0 0
      %631 = vmatprep.subr.bf16.mxu0 0
      %632 = vmatpush1.bf16.msra.mxu0 0
      %633 = vmatprep.subr.bf16.mxu0 0
      %634 = vmatpush1.bf16.msra.mxu0 0
      %635 = vmatprep.subr.bf16.mxu0 %v418
      %636 = vmatpush1.bf16.msra.mxu0 %v417
      %637 = vmatprep.subr.bf16.mxu0 %v406
      %638 = vmatpush1.bf16.msra.mxu0 %v405
      %639 = vmatprep.subr.bf16.mxu0 %v394
      %640 = vmatpush1.bf16.msra.mxu0 %v393
      %641 = vmatprep.subr.bf16.mxu0 0
      %642 = vmatpush2.bf16.msra.mxu0 0
      %643 = vmatprep.subr.bf16.mxu0 0
      %644 = vmatpush2.bf16.msra.mxu0 0
      %645 = vmatprep.subr.bf16.mxu0 0
      %646 = vmatpush2.bf16.msra.mxu0 0
      %647 = vmatprep.subr.bf16.mxu0 0
      %648 = vmatpush2.bf16.msra.mxu0 0
      %649 = vmatprep.subr.bf16.mxu0 0
      %650 = vmatpush2.bf16.msra.mxu0 0
      %651 = vmatprep.subr.bf16.mxu0 0
      %652 = vmatpush2.bf16.msra.mxu0 0
      %653 = vmatprep.subr.bf16.mxu0 0
      %654 = vmatpush2.bf16.msra.mxu0 0
      %655 = vmatprep.subr.bf16.mxu0 0
      %656 = vmatpush2.bf16.msra.mxu0 0
      %657 = vmatprep.mubr.bf16.mxu0 0
      %658 = vmatmul.mubr.bf16.gmra.mxu0 %v459
      %v659 = vpop.f32.mrf.mxu0
      %v660 = vadd.f32 0.0, %v659
      %v661 = vpop.f32.mrf.mxu0
      %v662 = vadd.f32 0.0, %v661
      %v663 = vpop.f32.mrf.mxu0
      %v664 = vpop.f32.mrf.mxu0
      %665 = vdwg.mxu0
      %666 = vmatprep.subr.bf16.mxu0 0
      %667 = vmatpush1.bf16.msra.mxu0 0
      %668 = vmatprep.subr.bf16.mxu0 0
      %669 = vmatpush1.bf16.msra.mxu0 0
      %670 = vmatprep.subr.bf16.mxu0 0
      %671 = vmatpush1.bf16.msra.mxu0 0
      %672 = vmatprep.subr.bf16.mxu0 0
      %673 = vmatpush1.bf16.msra.mxu0 0
      %674 = vmatprep.subr.bf16.mxu0 0
      %675 = vmatpush1.bf16.msra.mxu0 0
      %676 = vmatprep.subr.bf16.mxu0 %v420
      %677 = vmatpush1.bf16.msra.mxu0 %v419
      %678 = vmatprep.subr.bf16.mxu0 %v408
      %679 = vmatpush1.bf16.msra.mxu0 %v407
      %680 = vmatprep.subr.bf16.mxu0 %v396
      %681 = vmatpush1.bf16.msra.mxu0 %v395
      %682 = vmatprep.subr.bf16.mxu0 0
      %683 = vmatpush2.bf16.msra.mxu0 0
      %684 = vmatprep.subr.bf16.mxu0 0
      %685 = vmatpush2.bf16.msra.mxu0 0
      %686 = vmatprep.subr.bf16.mxu0 0
      %687 = vmatpush2.bf16.msra.mxu0 0
      %688 = vmatprep.subr.bf16.mxu0 0
      %689 = vmatpush2.bf16.msra.mxu0 0
      %690 = vmatprep.subr.bf16.mxu0 0
      %691 = vmatpush2.bf16.msra.mxu0 0
      %692 = vmatprep.subr.bf16.mxu0 0
      %693 = vmatpush2.bf16.msra.mxu0 0
      %694 = vmatprep.subr.bf16.mxu0 0
      %695 = vmatpush2.bf16.msra.mxu0 0
      %696 = vmatprep.subr.bf16.mxu0 0
      %697 = vmatpush2.bf16.msra.mxu0 0
      %698 = vmatprep.mubr.bf16.mxu0 0
      %699 = vmatmul.mubr.bf16.gmra.mxu0 %v459
      %v700 = vpop.f32.mrf.mxu0
      %v701 = vadd.f32 0.0, %v700
      %v702 = vpop.f32.mrf.mxu0
      %v703 = vadd.f32 0.0, %v702
      %v704 = vpop.f32.mrf.mxu0
      %v705 = vpop.f32.mrf.mxu0
      %706 = vdwg.mxu0
      %v707 = vadd.f32 %v226, %v496
      %v708 = vadd.f32 %v227, %v498
      %v709 = vadd.f32 %v228, %v537
      %v710 = vadd.f32 %v229, %v539
      %v711 = vadd.f32 %v230, %v578
      %v712 = vadd.f32 %v231, %v580
      %v713 = vadd.f32 %v232, %v619
      %v714 = vadd.f32 %v233, %v621
      %v715 = vadd.f32 %v234, %v660
      %v716 = vadd.f32 %v235, %v662
      %v717 = vadd.f32 %v236, %v701
      %v718 = vadd.f32 %v237, %v703
      %719 = vst [vmem:[%s207] sm:$0xff] %v707
      %720 = vst [vmem:[%s207 + $0x8] sm:$0xff] %v708
      %721 = vst [vmem:[%s207 + $0x10] sm:$0xff] %v709
      %722 = vst [vmem:[%s207 + $0x18] sm:$0xff] %v710
      %723 = vst [vmem:[%s207 + $0x20] sm:$0xff] %v711
      %724 = vst [vmem:[%s207 + $0x28] sm:$0xff] %v712
      %725 = vst [vmem:[%s207 + $0x30] sm:$0xff] %v713
      %726 = vst [vmem:[%s207 + $0x38] sm:$0xff] %v714
      %727 = vst [vmem:[%s207 + $0x40] sm:$0xff] %v715
      %728 = vst [vmem:[%s207 + $0x48] sm:$0xff] %v716
      %729 = vst [vmem:[%s207 + $0x50] sm:$0xff] %v717
      %730 = vst [vmem:[%s207 + $0x58] sm:$0xff] %v718
      %s731 = smul.u32 12, %s19
      %p732 = scmp.lt.s32.totalorder %s18, 1
      %s733 = scalar_select %p732, %s18, 1
      %p734 = scmp.lt.s32.totalorder %s731, 11
      %s735 = scalar_select %p734, %s731, 11
      %s736 = smul.addr %s733, 12
      %s737 = sadd.s32 %s735, %s736
      %s738 = smul.addr %s737, 8
      %s739 = scalar_lea.vmem %s2, %s738
      // Predicated region
      $region33: #{deform_conv2d_pallas.1} parent=27 // pred_check
        %p740 = pneg %p103
      $region34: #{deform_conv2d_pallas.1} parent=27 // pred_check_branch
        %742 = sbr.rel (%p740) target = $region36
      $region35: #{deform_conv2d_pallas.1} parent=27 // pred_region
        %s743 = smul.u32 12, %s19
      $region36: #{deform_conv2d_pallas.1} parent=27 // pred_fallthru
        _
    $region28: #{deform_conv2d_pallas.1} parent=5 // pred_fallthru
      _
    %p744 = scmp.le.s32.totalorder 2, %s8
    // Predicated region
    $region37: #{deform_conv2d_pallas.1} parent=5 // pred_check
      %p745 = pneg %p744
    $region38: #{deform_conv2d_pallas.1} parent=5 // pred_check_branch
      %747 = sbr.rel (%p745) target = $region40
    $region39: #{deform_conv2d_pallas.1} parent=5 // pred_region
      %s748 = ssub.s32 %s8, 2
      // Predicated region
      $region41: #{deform_conv2d_pallas.1} parent=39 // pred_check
        %p749 = pneg %p109
      $region42: #{deform_conv2d_pallas.1} parent=39 // pred_check_branch
        %751 = sbr.rel (%p749) target = $region44
      $region43: #{deform_conv2d_pallas.1} parent=39 // pred_region
        %s752 = smul.u32 12, %s22
        %p753 = scmp.lt.s32.totalorder %s21, 1
        %s754 = scalar_select %p753, %s21, 1
        %p755 = scmp.lt.s32.totalorder %s752, 11
        %s756 = scalar_select %p755, %s752, 11
        %s757 = smul.addr %s754, 12
        %s758 = sadd.s32 %s756, %s757
        %s759 = smul.addr %s758, 8
        %s760 = scalar_lea.vmem %s2, %s759
      $region44: #{deform_conv2d_pallas.1} parent=39 // pred_fallthru
        _
    $region40: #{deform_conv2d_pallas.1} parent=5 // pred_fallthru
      _
  $region6: #{deform_conv2d_pallas.1} parent=0 // loop_footer
    %s12 = sadd.s32 1, %s8
  $region7: #{deform_conv2d_pallas.1} parent=0 // loop_footer_branch
    %7 = sbr.rel target = $region3
  $region8: #{deform_conv2d_pallas.1} parent=0 // loop_exit
    _

</llo_original>
